<compile_context>
chip_gen: v7x
topology: tpu7x:2x2x1
jax: 0.10.0
libtpu: 0.0.40
codegen_flags: <defaults>
</compile_context>

<pallas_src>
import functools

import numpy as np
import jax
import jax.numpy as jnp
from jax.experimental import pallas as pl
from jax.experimental.pallas import tpu as pltpu


def _round_up(n, m):
    return ((n + m - 1) // m) * m


def _routing_tables(depth):
    """Sign/select matrix W (n_node, depth*n_leaf) and bias b (1, depth*n_leaf) s.t.
         factors = dec @ W + b
         factors[:, j*n_leaf + l] = dec[:, node_j(l)]       if leaf l goes left at layer j
                                  = 1 - dec[:, node_j(l)]   if it goes right
    """
    n_node = 2 ** depth - 1
    n_leaf = 2 ** depth
    w = np.zeros((n_node, depth * n_leaf), np.float32)
    b = np.zeros((1, depth * n_leaf), np.float32)
    for j in range(depth):
        for leaf in range(n_leaf):
            node = (2 ** j - 1) + (leaf >> (depth - j))
            bit = (leaf >> (depth - 1 - j)) & 1
            col = j * n_leaf + leaf
            w[node, col] = 1.0 - 2.0 * bit     # +dec for left branch, -dec for right
            b[0, col] = float(bit)             # right branch contributes the 1 of (1 - dec)
    return w, b


def _tree_kernel(x_ref, w_ref, b_ref, ws_ref, wb_ref, pi_ref, out_ref, *, depth):
    """One tile of tokens: linear -> sigmoid -> lane-parallel routing -> leaf mixture."""
    n_leaf = 2 ** depth

    # decision = sigmoid(x @ W + b)                      (tm, n_node), f32
    logits = jnp.dot(x_ref[...], w_ref[...],
                     preferred_element_type=jnp.float32) + b_ref[...]
    dec = jax.nn.sigmoid(logits)

    # Per-layer routing factors for every leaf, built with one tiny MXU matmul.
    factors = jnp.dot(dec, ws_ref[...],
                      preferred_element_type=jnp.float32) + wb_ref[...]

    routing = factors[:, 0:n_leaf]
    for j in range(1, depth):
        routing = routing * factors[:, j * n_leaf:(j + 1) * n_leaf]

    # prediction = routing @ softmax(pi)   (softmax precomputed in the wrapper)
    out_ref[...] = jnp.dot(routing, pi_ref[...],
                           preferred_element_type=jnp.float32).astype(out_ref.dtype)


def _choose_tiling(M, tm):
    """8-aligned token tile + padded M; split so big problems get >= 2 grid steps
    (megacore sharding of the "parallel" axis on v7x)."""
    tm_eff = min(tm, _round_up(M, 8))
    if M >= 512 and _round_up(M, tm_eff) // tm_eff < 2:
        tm_eff = _round_up(-(-M // 2), 8)
    m_pad = _round_up(M, tm_eff)
    return tm_eff, m_pad


def tree_forward(x, fc_w, fc_b, pi, *, depth, tm=2048,
                 compute_dtype=jnp.bfloat16):
    """x: (B, T, D); fc_w: (n_node, D); fc_b: (n_node,); pi: (n_leaf, n_label)."""
    B, T, D = x.shape
    n_node = 2 ** depth - 1
    n_leaf = 2 ** depth
    n_label = pi.shape[1]
    assert fc_w.shape == (n_node, D)
    assert pi.shape == (n_leaf, n_label)

    M = B * T
    tm_eff, m_pad = _choose_tiling(M, tm)
    grid = m_pad // tm_eff

    x2 = x.reshape(M, D).astype(compute_dtype)
    if m_pad != M:
        x2 = jnp.pad(x2, ((0, m_pad - M), (0, 0)))

    # Grid-invariant work hoisted out of the kernel.
    w_t = jnp.asarray(fc_w).T.astype(compute_dtype)                 # (D, n_node)
    b2 = jnp.asarray(fc_b, jnp.float32).reshape(1, n_node)
    pi_sm = jax.nn.softmax(jnp.asarray(pi, jnp.float32), axis=1)    # (n_leaf, n_label)
    w_route, b_route = _routing_tables(depth)
    w_route = jnp.asarray(w_route)
    b_route = jnp.asarray(b_route)

    kernel = functools.partial(_tree_kernel, depth=depth)

    out = pl.pallas_call(
        kernel,
        out_shape=jax.ShapeDtypeStruct((m_pad, n_label), jnp.float32),
        grid_spec=pltpu.PrefetchScalarGridSpec(
            num_scalar_prefetch=0,
            grid=(grid,),
            in_specs=[
                pl.BlockSpec((tm_eff, D), lambda i: (i, 0)),              # x tile
                pl.BlockSpec((D, n_node), lambda i: (0, 0)),              # fc weight^T
                pl.BlockSpec((1, n_node), lambda i: (0, 0)),              # fc bias
                pl.BlockSpec((n_node, depth * n_leaf), lambda i: (0, 0)), # routing signs
                pl.BlockSpec((1, depth * n_leaf), lambda i: (0, 0)),      # routing bias
                pl.BlockSpec((n_leaf, n_label), lambda i: (0, 0)),        # softmax(pi)
            ],
            out_specs=pl.BlockSpec((tm_eff, n_label), lambda i: (i, 0)),
        ),
        compiler_params=pltpu.CompilerParams(
            dimension_semantics=("parallel",)),
    )(x2, w_t, b2, w_route, b_route, pi_sm)

    return out[:M].reshape(B, T, n_label)


def tree_reference(x, fc_w, fc_b, pi, *, depth):
    """Pure-JAX reference mirroring the PyTorch forward exactly."""
    B, T, _ = x.shape
    n_leaf = 2 ** depth
    dec = jax.nn.sigmoid(jnp.einsum("btd,nd->btn", x, fc_w) + fc_b)
    dec = dec[..., None]
    dec = jnp.concatenate([dec, 1.0 - dec], axis=3)          # (B, T, n_node, 2)
    routing = jnp.ones((B, T, 1, 1), jnp.float32)
    begin, end = 0, 1
    for _ in range(depth):
        routing = jnp.repeat(routing.reshape(B, T, -1, 1), 2, axis=3)
        routing = routing * dec[:, :, begin:end, :]
        begin, end = end, 2 * end + 1
    routing = routing.reshape(B, T, n_leaf)
    return jnp.matmul(routing, jax.nn.softmax(pi, axis=1))


if __name__ == "__main__":
    depth = 3
    n_node = 2 ** depth - 1      # 7
    n_leaf = 2 ** depth          # 8
    n_label = 5
    D = 32

    def make_inputs(key, B, T):
        kx, kw, kb, kp = jax.random.split(key, 4)
        bound = 1.0 / (D ** 0.5)
        x = jax.random.normal(kx, (B, T, D), dtype=jnp.float32)
        fc_w = jax.random.uniform(kw, (n_node, D), jnp.float32, -bound, bound)
        fc_b = jax.random.uniform(kb, (n_node,), jnp.float32, -bound, bound)
        pi = jax.random.uniform(kp, (n_leaf, n_label), jnp.float32)
        return x, fc_w, fc_b, pi

    # 1) small exact-fit case, f32 inputs (tight tolerance)
    x, fc_w, fc_b, pi = make_inputs(jax.random.PRNGKey(0), 2, 8)
    out = jax.block_until_ready(
        tree_forward(x, fc_w, fc_b, pi, depth=depth, compute_dtype=jnp.float32))
    ref = tree_reference(x, fc_w, fc_b, pi, depth=depth)
    assert out.shape == (2, 8, n_label)
    assert jnp.allclose(out, ref, atol=1e-4, rtol=1e-4), "f32 mismatch vs reference"

    # 2) same case with bf16 streaming inputs (halved HBM traffic path)
    out_bf = jax.block_until_ready(
        tree_forward(x, fc_w, fc_b, pi, depth=depth, compute_dtype=jnp.bfloat16))
    assert jnp.allclose(out_bf, ref, atol=2e-2, rtol=2e-2), "bf16 mismatch vs reference"

    # 3) multi-step grid + padded tail (B*T not a multiple of the tile)
    x3, fc_w3, fc_b3, pi3 = make_inputs(jax.random.PRNGKey(1), 3, 37)   # M = 111
    out3 = jax.block_until_ready(
        tree_forward(x3, fc_w3, fc_b3, pi3, depth=depth, tm=32,
                     compute_dtype=jnp.bfloat16))
    ref3 = tree_reference(x3, fc_w3, fc_b3, pi3, depth=depth)
    assert out3.shape == (3, 37, n_label)
    assert jnp.allclose(out3, ref3, atol=2e-2, rtol=2e-2), "tail mismatch vs reference"

    # 4) large-M case exercising the megacore split (grid >= 2 "parallel" steps)
    x4, fc_w4, fc_b4, pi4 = make_inputs(jax.random.PRNGKey(2), 4, 300)  # M = 1200
    out4 = jax.block_until_ready(
        tree_forward(x4, fc_w4, fc_b4, pi4, depth=depth,
                     compute_dtype=jnp.bfloat16))
    ref4 = tree_reference(x4, fc_w4, fc_b4, pi4, depth=depth)
    assert out4.shape == (4, 300, n_label)
    assert jnp.allclose(out4, ref4, atol=2e-2, rtol=2e-2), "large-M mismatch vs reference"

    print("KERNEL_OK")
</pallas_src>

<mosaic_0001>
module attributes {stable_mosaic.version = 11 : i64} {
  func.func @_tree_kernel(%arg0: i32, %arg1: memref<16x32xf32, #tpu.memory_space<vmem>>, %arg2: memref<32x7xf32, #tpu.memory_space<vmem>>, %arg3: memref<1x7xf32, #tpu.memory_space<vmem>>, %arg4: memref<7x24xf32, #tpu.memory_space<vmem>>, %arg5: memref<1x24xf32, #tpu.memory_space<vmem>>, %arg6: memref<8x5xf32, #tpu.memory_space<vmem>>, %arg7: memref<16x5xf32, #tpu.memory_space<vmem>>) attributes {dimension_semantics = [#tpu.dimension_semantics<parallel>], iteration_bounds = array<i64: 1>, scalar_prefetch = 0 : i64, scratch_operands = 0 : i64, tpu.core_type = #tpu.core_type<tc>, window_params = [{transform_indices = @transform_0, window_bounds = array<i64: 16, 32>}, {pipeline_mode = #tpu.pipeline_mode<synchronous>, transform_indices = @transform_1, window_bounds = array<i64: 32, 7>}, {pipeline_mode = #tpu.pipeline_mode<synchronous>, transform_indices = @transform_2, window_bounds = array<i64: 1, 7>}, {pipeline_mode = #tpu.pipeline_mode<synchronous>, transform_indices = @transform_3, window_bounds = array<i64: 7, 24>}, {pipeline_mode = #tpu.pipeline_mode<synchronous>, transform_indices = @transform_4, window_bounds = array<i64: 1, 24>}, {pipeline_mode = #tpu.pipeline_mode<synchronous>, transform_indices = @transform_5, window_bounds = array<i64: 8, 5>}, {transform_indices = @transform_6, window_bounds = array<i64: 16, 5>}]} {
    %c0 = arith.constant 0 : index
    %c0_0 = arith.constant 0 : index
    %0 = vector.load %arg1[%c0, %c0_0] : memref<16x32xf32, #tpu.memory_space<vmem>>, vector<16x32xf32>
    %c0_1 = arith.constant 0 : index
    %c0_2 = arith.constant 0 : index
    %1 = vector.load %arg2[%c0_1, %c0_2] : memref<32x7xf32, #tpu.memory_space<vmem>>, vector<32x7xf32>
    %cst = arith.constant dense<0.000000e+00> : vector<16x7xf32>
    %2 = tpu.matmul %0, %1, %cst {dimension_numbers = #tpu.dot_dimension_numbers<[1], [0], [0], [1], [0, 0, 1, 1], [], []>} : vector<16x32xf32>, vector<32x7xf32>, vector<16x7xf32> -> vector<16x7xf32>
    %c0_3 = arith.constant 0 : index
    %c0_4 = arith.constant 0 : index
    %3 = vector.load %arg3[%c0_3, %c0_4] : memref<1x7xf32, #tpu.memory_space<vmem>>, vector<1x7xf32>
    %4 = vector.broadcast %3 : vector<1x7xf32> to vector<16x7xf32>
    %5 = arith.addf %2, %4 : vector<16x7xf32>
    %6 = arith.negf %5 : vector<16x7xf32>
    %7 = math.exp %6 : vector<16x7xf32>
    %cst_5 = arith.constant 1.000000e+00 : f32
    %8 = vector.broadcast %cst_5 : f32 to vector<16x7xf32>
    %9 = arith.addf %8, %7 : vector<16x7xf32>
    %10 = arith.divf %8, %9 : vector<16x7xf32>
    %c0_6 = arith.constant 0 : index
    %c0_7 = arith.constant 0 : index
    %11 = vector.load %arg4[%c0_6, %c0_7] : memref<7x24xf32, #tpu.memory_space<vmem>>, vector<7x24xf32>
    %cst_8 = arith.constant dense<0.000000e+00> : vector<16x24xf32>
    %12 = tpu.matmul %10, %11, %cst_8 {dimension_numbers = #tpu.dot_dimension_numbers<[1], [0], [0], [1], [0, 0, 1, 1], [], []>} : vector<16x7xf32>, vector<7x24xf32>, vector<16x24xf32> -> vector<16x24xf32>
    %c0_9 = arith.constant 0 : index
    %c0_10 = arith.constant 0 : index
    %13 = vector.load %arg5[%c0_9, %c0_10] : memref<1x24xf32, #tpu.memory_space<vmem>>, vector<1x24xf32>
    %14 = vector.broadcast %13 : vector<1x24xf32> to vector<16x24xf32>
    %15 = arith.addf %12, %14 : vector<16x24xf32>
    %16 = vector.extract_strided_slice %15 {offsets = [0, 0], sizes = [16, 8], strides = [1, 1]} : vector<16x24xf32> to vector<16x8xf32>
    %17 = vector.extract_strided_slice %15 {offsets = [0, 8], sizes = [16, 8], strides = [1, 1]} : vector<16x24xf32> to vector<16x8xf32>
    %18 = arith.mulf %16, %17 : vector<16x8xf32>
    %19 = vector.extract_strided_slice %15 {offsets = [0, 16], sizes = [16, 8], strides = [1, 1]} : vector<16x24xf32> to vector<16x8xf32>
    %20 = arith.mulf %18, %19 : vector<16x8xf32>
    %c0_11 = arith.constant 0 : index
    %c0_12 = arith.constant 0 : index
    %21 = vector.load %arg6[%c0_11, %c0_12] : memref<8x5xf32, #tpu.memory_space<vmem>>, vector<8x5xf32>
    %cst_13 = arith.constant dense<0.000000e+00> : vector<16x5xf32>
    %22 = tpu.matmul %20, %21, %cst_13 {dimension_numbers = #tpu.dot_dimension_numbers<[1], [0], [0], [1], [0, 0, 1, 1], [], []>} : vector<16x8xf32>, vector<8x5xf32>, vector<16x5xf32> -> vector<16x5xf32>
    %c0_14 = arith.constant 0 : index
    %c0_15 = arith.constant 0 : index
    %23 = vector.load %arg7[%c0_14, %c0_15] : memref<16x5xf32, #tpu.memory_space<vmem>>, vector<16x5xf32>
    tpu.vector_store %arg7[%c0_14, %c0_15], %22 {strides = array<i32>} : memref<16x5xf32, #tpu.memory_space<vmem>>, vector<16x5xf32>,
    return
  }
  func.func @transform_0(%arg0: i32) -> (i32, i32) {
    %c0_i32 = arith.constant 0 : i32
    %c0_i32_0 = arith.constant 0 : i32
    return %arg0, %c0_i32 : i32, i32
  }
  func.func @transform_1(%arg0: i32) -> (i32, i32) {
    %c0_i32 = arith.constant 0 : i32
    %c0_i32_0 = arith.constant 0 : i32
    %c0_i32_1 = arith.constant 0 : i32
    return %c0_i32, %c0_i32_0 : i32, i32
  }
  func.func @transform_2(%arg0: i32) -> (i32, i32) {
    %c0_i32 = arith.constant 0 : i32
    %c0_i32_0 = arith.constant 0 : i32
    %c0_i32_1 = arith.constant 0 : i32
    return %c0_i32, %c0_i32_0 : i32, i32
  }
  func.func @transform_3(%arg0: i32) -> (i32, i32) {
    %c0_i32 = arith.constant 0 : i32
    %c0_i32_0 = arith.constant 0 : i32
    %c0_i32_1 = arith.constant 0 : i32
    return %c0_i32, %c0_i32_0 : i32, i32
  }
  func.func @transform_4(%arg0: i32) -> (i32, i32) {
    %c0_i32 = arith.constant 0 : i32
    %c0_i32_0 = arith.constant 0 : i32
    %c0_i32_1 = arith.constant 0 : i32
    return %c0_i32, %c0_i32_0 : i32, i32
  }
  func.func @transform_5(%arg0: i32) -> (i32, i32) {
    %c0_i32 = arith.constant 0 : i32
    %c0_i32_0 = arith.constant 0 : i32
    %c0_i32_1 = arith.constant 0 : i32
    return %c0_i32, %c0_i32_0 : i32, i32
  }
  func.func @transform_6(%arg0: i32) -> (i32, i32) {
    %c0_i32 = arith.constant 0 : i32
    %c0_i32_0 = arith.constant 0 : i32
    return %arg0, %c0_i32 : i32, i32
  }
}

</mosaic_0001>

<llo_original>
// kernel: tpu_custom_call.1
$region0: #{tpu_custom_call.1}
  #allocation0 [shape = 'u32[]', space=smem, size = 0x4, offset = 0x4, fixed_abs, tag = 'smem constant byte address 0x4 - core index']
  #allocation1 [shape = 'u32[144,128]{1,0:T(1,128)}', space=vmem, size = 0x12000, scoped, tag = 'internal scratch']
  %s0 = inlined_call_operand.vmem [shape: f32[16,32], index: 0, kind: input, shape index: {}]
  %s1 = inlined_call_operand.vmem [shape: f32[32,7], index: 1, kind: input, shape index: {}]
  %s2 = inlined_call_operand.vmem [shape: f32[1,7], index: 2, kind: input, shape index: {}]
  %s3 = inlined_call_operand.vmem [shape: f32[7,24], index: 3, kind: input, shape index: {}]
  %s4 = inlined_call_operand.vmem [shape: f32[1,24], index: 4, kind: input, shape index: {}]
  %s5 = inlined_call_operand.vmem [shape: f32[8,5], index: 5, kind: input, shape index: {}]
  %s6 = inlined_call_operand.vmem [shape: f32[16,5], index: 6, kind: output, shape index: {}]
  %s7 = sld [smem:[#allocation0]]
  $region34: #{tpu_custom_call.1} parent=0
    _
  %s9 = ssub.s32 1, %s7
  %s10 = scalar_select 0, %s9, %s7
  // Predicated region
  $region2: #{tpu_custom_call.1} parent=0 // pred_check
    _
  $region3: #{tpu_custom_call.1} parent=0 // pred_check_branch
    %12 = sbr.rel (0) target = $region5
  $region4: #{tpu_custom_call.1} parent=0 // pred_region
    _
  $region5: #{tpu_custom_call.1} parent=0 // pred_fallthru
    _
  // Predicated region
  $region6: #{tpu_custom_call.1} parent=0 // pred_check
    _
  $region7: #{tpu_custom_call.1} parent=0 // pred_check_branch
    %14 = sbr.rel (0) target = $region9
  $region8: #{tpu_custom_call.1} parent=0 // pred_region
    _
  $region9: #{tpu_custom_call.1} parent=0 // pred_fallthru
    _
  // Predicated region
  $region10: #{tpu_custom_call.1} parent=0 // pred_check
    _
  $region11: #{tpu_custom_call.1} parent=0 // pred_check_branch
    %16 = sbr.rel (0) target = $region13
  $region12: #{tpu_custom_call.1} parent=0 // pred_region
    _
  $region13: #{tpu_custom_call.1} parent=0 // pred_fallthru
    _
  // Predicated region
  $region14: #{tpu_custom_call.1} parent=0 // pred_check
    _
  $region15: #{tpu_custom_call.1} parent=0 // pred_check_branch
    %18 = sbr.rel (0) target = $region17
  $region16: #{tpu_custom_call.1} parent=0 // pred_region
    _
  $region17: #{tpu_custom_call.1} parent=0 // pred_fallthru
    _
  // Predicated region
  $region18: #{tpu_custom_call.1} parent=0 // pred_check
    _
  $region19: #{tpu_custom_call.1} parent=0 // pred_check_branch
    %20 = sbr.rel (0) target = $region21
  $region20: #{tpu_custom_call.1} parent=0 // pred_region
    _
  $region21: #{tpu_custom_call.1} parent=0 // pred_fallthru
    _
  // Predicated region
  $region22: #{tpu_custom_call.1} parent=0 // pred_check
    _
  $region23: #{tpu_custom_call.1} parent=0 // pred_check_branch
    %22 = sbr.rel (0) target = $region25
  $region24: #{tpu_custom_call.1} parent=0 // pred_region
    _
  $region25: #{tpu_custom_call.1} parent=0 // pred_fallthru
    _
  %v23 = vld [vmem:[%s0] sm:$0xff]
  %v24 = vld [vmem:[%s0 + $0x8] sm:$0xff]
  %v25 = vld [vmem:[%s1] sm:$0xff]
  %v26 = vld [vmem:[%s1 + $0x8] sm:$0xff]
  %v27 = vld [vmem:[%s1 + $0x10] sm:$0xff]
  %v28 = vld [vmem:[%s1 + $0x18] sm:$0xff]
  %v29 = vld [vmem:[%s2] sm:$0x1]
  %v31 = vlaneseq
  %v32 = vshrl.u32 %v31, 7
  %v33 = vsub.s32 0, %v32
  %v34 = vrot.slane %v29, %v33
  %vm36 = vcmask 261120
  %v38 = vsel %vm36, %v23, 0
  %v41 = vsel %vm36, %v24, 0
  %43 = vmatprep.subr.mxu0 0.0
  %44 = vmatpush1.msra.mxu0 %v25
  %45 = vmatprep.subr.mxu0 0.0
  %46 = vmatpush1.msra.mxu0 %v26
  %47 = vmatprep.subr.mxu0 0.0
  %48 = vmatpush1.msra.mxu0 %v27
  %49 = vmatprep.subr.mxu0 0.0
  %50 = vmatpush1.msra.mxu0 %v28
  %51 = vmatprep.subr.mxu0 0.0
  %52 = vmatpush1.msra.mxu0 0.0
  %53 = vmatprep.subr.mxu0 0.0
  %54 = vmatpush1.msra.mxu0 0.0
  %55 = vmatprep.subr.mxu0 0.0
  %56 = vmatpush1.msra.mxu0 0.0
  %57 = vmatprep.subr.mxu0 0.0
  %58 = vmatpush1.msra.mxu0 0.0
  %59 = vmatprep.subr.mxu0 0.0
  %60 = vmatpush1.msra.mxu0 0.0
  %61 = vmatprep.subr.mxu0 0.0
  %62 = vmatpush1.msra.mxu0 0.0
  %63 = vmatprep.subr.mxu0 0.0
  %64 = vmatpush1.msra.mxu0 0.0
  %65 = vmatprep.subr.mxu0 0.0
  %66 = vmatpush1.msra.mxu0 0.0
  %67 = vmatprep.subr.mxu0 0.0
  %68 = vmatpush1.msra.mxu0 0.0
  %69 = vmatprep.subr.mxu0 0.0
  %70 = vmatpush1.msra.mxu0 0.0
  %71 = vmatprep.subr.mxu0 0.0
  %72 = vmatpush1.msra.mxu0 0.0
  %73 = vmatprep.subr.mxu0 0.0
  %74 = vmatpush1.msra.mxu0 0.0
  %75 = vmatprep.subr.mxu0 0.0
  %76 = vmatpush1.msra.mxu0 0.0
  %77 = vmatprep.subr.mxu0 0.0
  %78 = vmatpush1.msra.mxu0 0.0
  %79 = vmatprep.subr.mxu0 0.0
  %80 = vmatpush1.msra.mxu0 0.0
  %81 = vmatprep.subr.mxu0 0.0
  %82 = vmatpush1.msra.mxu0 0.0
  %83 = vmatprep.subr.mxu0 0.0
  %84 = vmatpush1.msra.mxu0 0.0
  %85 = vmatprep.subr.mxu0 0.0
  %86 = vmatpush1.msra.mxu0 0.0
  %87 = vmatprep.subr.mxu0 0.0
  %88 = vmatpush1.msra.mxu0 0.0
  %89 = vmatprep.subr.mxu0 0.0
  %90 = vmatpush1.msra.mxu0 0.0
  %91 = vmatprep.subr.mxu0 0.0
  %92 = vmatpush1.msra.mxu0 0.0
  %93 = vmatprep.subr.mxu0 0.0
  %94 = vmatpush1.msra.mxu0 0.0
  %95 = vmatprep.subr.mxu0 0.0
  %96 = vmatpush1.msra.mxu0 0.0
  %97 = vmatprep.subr.mxu0 0.0
  %98 = vmatpush1.msra.mxu0 0.0
  %99 = vmatprep.subr.mxu0 0.0
  %100 = vmatpush1.msra.mxu0 0.0
  %101 = vmatprep.subr.mxu0 0.0
  %102 = vmatpush1.msra.mxu0 0.0
  %103 = vmatprep.subr.mxu0 0.0
  %104 = vmatpush1.msra.mxu0 0.0
  %105 = vmatprep.subr.mxu0 0.0
  %106 = vmatpush1.msra.mxu0 0.0
  %107 = vmatprep.mubr.f32.mxu0 0.0
  %108 = vmatmul.mubr.f32.gmra.mrb[0].mxu0 %v38
  %v109 = vpop.f32.mrb[0].mxu0
  %v110 = vadd.f32 %v34, %v109
  %v111 = vpop.f32.mrb[0].mxu0
  %112 = vmatprep.mubr.f32.mxu0 0.0
  %113 = vmatmul.mubr.f32.gmra.mrb[0].mxu0 %v41
  %v114 = vpop.f32.mrb[0].mxu0
  %v115 = vadd.f32 %v34, %v114
  %v116 = vpop.f32.mrb[0].mxu0
  %117 = vdwg.mxu0
  %v118 = vxor.u32 %v110, 2147483648
  %v119 = vxor.u32 %v115, 2147483648
  %v120 = vmul.f32 %v118, 1.442695
  %v121 = vpow.pop %v120
  %v122 = vmul.f32 %v119, 1.442695
  %v123 = vpow.pop %v122
  %v124 = vadd.f32 %v121, 1.0
  %v125 = vadd.f32 %v123, 1.0
  %v126 = vrcp.pop %v124
  %v127 = vmul.f32 1.0, %v126
  %v128 = vrcp.pop %v125
  %v129 = vmul.f32 1.0, %v128
  %v130 = vld [vmem:[%s3] sm:$0x7f]
  %v131 = vld [vmem:[%s4] sm:$0x1]
  %v133 = vlaneseq
  %v134 = vshrl.u32 %v133, 7
  %v135 = vsub.s32 0, %v134
  %v136 = vrot.slane %v131, %v135
  %vm138 = vcmask 56320
  %v140 = vsel %vm138, %v127, 0
  %v143 = vsel %vm138, %v129, 0
  %vm145 = vcmask 1046528
  %v147 = vsel %vm145, %v130, 0
  %149 = vmatprep.subr.mxu0 0.0
  %150 = vmatpush1.msra.mxu0 %v147
  %151 = vmatprep.subr.mxu0 0.0
  %152 = vmatpush1.msra.mxu0 0.0
  %153 = vmatprep.subr.mxu0 0.0
  %154 = vmatpush1.msra.mxu0 0.0
  %155 = vmatprep.subr.mxu0 0.0
  %156 = vmatpush1.msra.mxu0 0.0
  %157 = vmatprep.subr.mxu0 0.0
  %158 = vmatpush1.msra.mxu0 0.0
  %159 = vmatprep.subr.mxu0 0.0
  %160 = vmatpush1.msra.mxu0 0.0
  %161 = vmatprep.subr.mxu0 0.0
  %162 = vmatpush1.msra.mxu0 0.0
  %163 = vmatprep.subr.mxu0 0.0
  %164 = vmatpush1.msra.mxu0 0.0
  %165 = vmatprep.subr.mxu0 0.0
  %166 = vmatpush1.msra.mxu0 0.0
  %167 = vmatprep.subr.mxu0 0.0
  %168 = vmatpush1.msra.mxu0 0.0
  %169 = vmatprep.subr.mxu0 0.0
  %170 = vmatpush1.msra.mxu0 0.0
  %171 = vmatprep.subr.mxu0 0.0
  %172 = vmatpush1.msra.mxu0 0.0
  %173 = vmatprep.subr.mxu0 0.0
  %174 = vmatpush1.msra.mxu0 0.0
  %175 = vmatprep.subr.mxu0 0.0
  %176 = vmatpush1.msra.mxu0 0.0
  %177 = vmatprep.subr.mxu0 0.0
  %178 = vmatpush1.msra.mxu0 0.0
  %179 = vmatprep.subr.mxu0 0.0
  %180 = vmatpush1.msra.mxu0 0.0
  %181 = vmatprep.subr.mxu0 0.0
  %182 = vmatpush1.msra.mxu0 0.0
  %183 = vmatprep.subr.mxu0 0.0
  %184 = vmatpush1.msra.mxu0 0.0
  %185 = vmatprep.subr.mxu0 0.0
  %186 = vmatpush1.msra.mxu0 0.0
  %187 = vmatprep.subr.mxu0 0.0
  %188 = vmatpush1.msra.mxu0 0.0
  %189 = vmatprep.subr.mxu0 0.0
  %190 = vmatpush1.msra.mxu0 0.0
  %191 = vmatprep.subr.mxu0 0.0
  %192 = vmatpush1.msra.mxu0 0.0
  %193 = vmatprep.subr.mxu0 0.0
  %194 = vmatpush1.msra.mxu0 0.0
  %195 = vmatprep.subr.mxu0 0.0
  %196 = vmatpush1.msra.mxu0 0.0
  %197 = vmatprep.subr.mxu0 0.0
  %198 = vmatpush1.msra.mxu0 0.0
  %199 = vmatprep.subr.mxu0 0.0
  %200 = vmatpush1.msra.mxu0 0.0
  %201 = vmatprep.subr.mxu0 0.0
  %202 = vmatpush1.msra.mxu0 0.0
  %203 = vmatprep.subr.mxu0 0.0
  %204 = vmatpush1.msra.mxu0 0.0
  %205 = vmatprep.subr.mxu0 0.0
  %206 = vmatpush1.msra.mxu0 0.0
  %207 = vmatprep.subr.mxu0 0.0
  %208 = vmatpush1.msra.mxu0 0.0
  %209 = vmatprep.subr.mxu0 0.0
  %210 = vmatpush1.msra.mxu0 0.0
  %211 = vmatprep.subr.mxu0 0.0
  %212 = vmatpush1.msra.mxu0 0.0
  %213 = vmatprep.mubr.f32.mxu0 0.0
  %214 = vmatmul.mubr.f32.gmra.mrb[0].mxu0 %v140
  %v215 = vpop.f32.mrb[0].mxu0
  %v216 = vadd.f32 %v136, %v215
  %v217 = vpop.f32.mrb[0].mxu0
  %218 = vmatprep.mubr.f32.mxu0 0.0
  %219 = vmatmul.mubr.f32.gmra.mrb[0].mxu0 %v143
  %v220 = vpop.f32.mrb[0].mxu0
  %v221 = vadd.f32 %v136, %v220
  %v222 = vpop.f32.mrb[0].mxu0
  %223 = vdwg.mxu0
  %226 = vrot.lane.b32.xlu0 %v216, 120
  %v227 = vpop.permute.xlu0 %226
  %228 = vrot.lane.b32.xlu0 %v221, 120
  %v229 = vpop.permute.xlu0 %228
  %v232 = vmul.f32 %v216, %v227
  %v233 = vmul.f32 %v221, %v229
  %234 = vrot.lane.b32.xlu0 %v216, 112
  %v235 = vpop.permute.xlu0 %234
  %236 = vrot.lane.b32.xlu0 %v221, 112
  %v237 = vpop.permute.xlu0 %236
  %v240 = vmul.f32 %v232, %v235
  %v241 = vmul.f32 %v233, %v237
  %v242 = vld [vmem:[%s5] sm:$0xff]
  %vm243 = vcmask 64512
  %v245 = vsel %vm243, %v240, 0
  %v248 = vsel %vm243, %v241, 0
  %250 = vmatprep.subr.mxu0 0.0
  %251 = vmatpush1.msra.mxu0 %v242
  %252 = vmatprep.subr.mxu0 0.0
  %253 = vmatpush1.msra.mxu0 0.0
  %254 = vmatprep.subr.mxu0 0.0
  %255 = vmatpush1.msra.mxu0 0.0
  %256 = vmatprep.subr.mxu0 0.0
  %257 = vmatpush1.msra.mxu0 0.0
  %258 = vmatprep.subr.mxu0 0.0
  %259 = vmatpush1.msra.mxu0 0.0
  %260 = vmatprep.subr.mxu0 0.0
  %261 = vmatpush1.msra.mxu0 0.0
  %262 = vmatprep.subr.mxu0 0.0
  %263 = vmatpush1.msra.mxu0 0.0
  %264 = vmatprep.subr.mxu0 0.0
  %265 = vmatpush1.msra.mxu0 0.0
  %266 = vmatprep.subr.mxu0 0.0
  %267 = vmatpush1.msra.mxu0 0.0
  %268 = vmatprep.subr.mxu0 0.0
  %269 = vmatpush1.msra.mxu0 0.0
  %270 = vmatprep.subr.mxu0 0.0
  %271 = vmatpush1.msra.mxu0 0.0
  %272 = vmatprep.subr.mxu0 0.0
  %273 = vmatpush1.msra.mxu0 0.0
  %274 = vmatprep.subr.mxu0 0.0
  %275 = vmatpush1.msra.mxu0 0.0
  %276 = vmatprep.subr.mxu0 0.0
  %277 = vmatpush1.msra.mxu0 0.0
  %278 = vmatprep.subr.mxu0 0.0
  %279 = vmatpush1.msra.mxu0 0.0
  %280 = vmatprep.subr.mxu0 0.0
  %281 = vmatpush1.msra.mxu0 0.0
  %282 = vmatprep.subr.mxu0 0.0
  %283 = vmatpush1.msra.mxu0 0.0
  %284 = vmatprep.subr.mxu0 0.0
  %285 = vmatpush1.msra.mxu0 0.0
  %286 = vmatprep.subr.mxu0 0.0
  %287 = vmatpush1.msra.mxu0 0.0
  %288 = vmatprep.subr.mxu0 0.0
  %289 = vmatpush1.msra.mxu0 0.0
  %290 = vmatprep.subr.mxu0 0.0
  %291 = vmatpush1.msra.mxu0 0.0
  %292 = vmatprep.subr.mxu0 0.0
  %293 = vmatpush1.msra.mxu0 0.0
  %294 = vmatprep.subr.mxu0 0.0
  %295 = vmatpush1.msra.mxu0 0.0
  %296 = vmatprep.subr.mxu0 0.0
  %297 = vmatpush1.msra.mxu0 0.0
  %298 = vmatprep.subr.mxu0 0.0
  %299 = vmatpush1.msra.mxu0 0.0
  %300 = vmatprep.subr.mxu0 0.0
  %301 = vmatpush1.msra.mxu0 0.0
  %302 = vmatprep.subr.mxu0 0.0
  %303 = vmatpush1.msra.mxu0 0.0
  %304 = vmatprep.subr.mxu0 0.0
  %305 = vmatpush1.msra.mxu0 0.0
  %306 = vmatprep.subr.mxu0 0.0
  %307 = vmatpush1.msra.mxu0 0.0
  %308 = vmatprep.subr.mxu0 0.0
  %309 = vmatpush1.msra.mxu0 0.0
  %310 = vmatprep.subr.mxu0 0.0
  %311 = vmatpush1.msra.mxu0 0.0
  %312 = vmatprep.subr.mxu0 0.0
  %313 = vmatpush1.msra.mxu0 0.0
  %314 = vmatprep.mubr.f32.mxu0 0.0
  %315 = vmatmul.mubr.f32.gmra.mrb[0].mxu0 %v245
  %v316 = vpop.f32.mrb[0].mxu0
  %v317 = vadd.f32 0.0, %v316
  %v318 = vpop.f32.mrb[0].mxu0
  %319 = vmatprep.mubr.f32.mxu0 0.0
  %320 = vmatmul.mubr.f32.gmra.mrb[0].mxu0 %v248
  %v321 = vpop.f32.mrb[0].mxu0
  %v322 = vadd.f32 0.0, %v321
  %v323 = vpop.f32.mrb[0].mxu0
  %324 = vdwg.mxu0
  %vm325 = vcmask 39936
  %326 = vst.msk [vmem:[%s6] sm:$0xff] %vm325, %v317
  %327 = vst.msk [vmem:[%s6 + $0x8] sm:$0xff] %vm325, %v322
  // Predicated region
  $region26: #{tpu_custom_call.1} parent=0 // pred_check
    _
  $region27: #{tpu_custom_call.1} parent=0 // pred_check_branch
    %329 = sbr.rel (0) target = $region29
  $region28: #{tpu_custom_call.1} parent=0 // pred_region
    _
  $region29: #{tpu_custom_call.1} parent=0 // pred_fallthru
    _
  // Predicated region
  $region30: #{tpu_custom_call.1} parent=0 // pred_check
    _
  $region31: #{tpu_custom_call.1} parent=0 // pred_check_branch
    %331 = sbr.rel (0) target = $region33
  $region32: #{tpu_custom_call.1} parent=0 // pred_region
    _
  $region33: #{tpu_custom_call.1} parent=0 // pred_fallthru
    _

</llo_original>
